<compile_context>
chip_gen: v7x
topology: tpu7x:2x2x1
jax: 0.10.0
libtpu: 0.0.40
codegen_flags: <defaults>
</compile_context>

<pallas_src>
import jax
import jax.numpy as jnp
from jax.experimental import pallas as pl
from jax.experimental.pallas import tpu as pltpu


def drift_kernel(x_ref, y_ref, fc_w_ref, fc_b_ref, rfc_w_ref, out_ref):
    # x:      (TB, F)  VMEM
    # y:      (TB, 1)  VMEM
    # fc_w:   (1, F)   VMEM  (PyTorch Linear weight layout: (out_features, in_features))
    # fc_b:   (1, 1)   SMEM  (scalar)
    # rfc_w:  (1, 1)   SMEM  (scalar)
    x = x_ref[...].astype(jnp.float32)
    y = y_ref[...].astype(jnp.float32)
    fc_w = fc_w_ref[...].astype(jnp.float32)     # (1, F), broadcasts over batch
    fc_b = fc_b_ref[0, 0]                        # scalar from SMEM
    rfc_w = rfc_w_ref[0, 0]                      # scalar from SMEM

    # fc(x) = x @ W.T + b  computed as a VPU multiply + lane reduce (F < 128,
    # output width 1 -> MXU would waste 127/128 output lanes).
    lin = jnp.sum(x * fc_w, axis=-1, keepdims=True) + fc_b   # (TB, 1)
    # rfc(y - 0.5) = (y - 0.5) * w_rfc
    act = (y - 0.5) * rfc_w + lin
    out_ref[...] = jax.nn.sigmoid(act).astype(out_ref.dtype)


def driftmodel_forward(t, x, y, fc_w, fc_b, rfc_w):
    """t is unused (matches PyTorch forward). Dropout p=0 -> identity."""
    del t
    B, F = x.shape

    # Batch tile: full batch if small, otherwise a multiple-of-8 tile that keeps
    # double-buffered inputs comfortably inside scoped VMEM on all generations
    # (including v7x's 64 MiB VMEM).
    TB = B if B <= 512 else 512
    grid = (pl.cdiv(B, TB),)

    return pl.pallas_call(
        drift_kernel,
        out_shape=jax.ShapeDtypeStruct((B, 1), jnp.float32),
        grid_spec=pl.GridSpec(
            grid=grid,
            in_specs=[
                pl.BlockSpec((TB, F), lambda i: (i, 0)),               # x, tiled over batch
                pl.BlockSpec((TB, 1), lambda i: (i, 0)),               # y, tiled over batch
                pl.BlockSpec((1, F), lambda i: (0, 0)),                # fc_w, resident
                pl.BlockSpec(memory_space=pltpu.SMEM),                 # fc_b scalar
                pl.BlockSpec(memory_space=pltpu.SMEM),                 # rfc_w scalar
            ],
            out_specs=pl.BlockSpec((TB, 1), lambda i: (i, 0)),
        ),
        compiler_params=pltpu.CompilerParams(
            dimension_semantics=("parallel",),
        ),
    )(x, y, fc_w, fc_b, rfc_w)


if __name__ == "__main__":
    input_size = 15
    batch = 8

    key = jax.random.PRNGKey(0)
    k_x, k_y, k_fcw, k_fcb, k_rfcw = jax.random.split(key, 5)

    # Deterministic inputs
    t = jnp.float32(0.0)  # unused by the forward pass
    x = jax.random.normal(k_x, (batch, input_size), dtype=jnp.float32)
    y_prev = jax.random.uniform(k_y, (batch, 1), dtype=jnp.float32)

    # Deterministic parameters (synthetic init, Linear-like uniform scale)
    bound = 1.0 / jnp.sqrt(jnp.float32(input_size))
    fc_w = jax.random.uniform(k_fcw, (1, input_size), minval=-bound, maxval=bound,
                              dtype=jnp.float32)
    fc_b = jax.random.uniform(k_fcb, (1, 1), minval=-bound, maxval=bound,
                              dtype=jnp.float32)
    rfc_w = jax.random.uniform(k_rfcw, (1, 1), minval=-1.0, maxval=1.0,
                               dtype=jnp.float32)

    out = driftmodel_forward(t, x, y_prev, fc_w, fc_b, rfc_w)
    out = jax.block_until_ready(out)

    # Reference check in plain JAX (same math as the PyTorch module)
    ref = jax.nn.sigmoid((y_prev - 0.5) * rfc_w + x @ fc_w.T + fc_b)
    assert out.shape == (batch, 1)
    assert jnp.allclose(out, ref, atol=1e-6), "mismatch vs reference"

    print("KERNEL_OK")
</pallas_src>

<mosaic_0001>
module attributes {stable_mosaic.version = 11 : i64} {
  func.func @drift_kernel(%arg0: i32, %arg1: memref<8x15xf32, #tpu.memory_space<vmem>>, %arg2: memref<8x1xf32, #tpu.memory_space<vmem>>, %arg3: memref<1x15xf32, #tpu.memory_space<vmem>>, %arg4: memref<1x1xf32, #tpu.memory_space<smem>>, %arg5: memref<1x1xf32, #tpu.memory_space<smem>>, %arg6: memref<8x1xf32, #tpu.memory_space<vmem>>) attributes {dimension_semantics = [#tpu.dimension_semantics<parallel>], iteration_bounds = array<i64: 1>, scalar_prefetch = 0 : i64, scratch_operands = 0 : i64, tpu.core_type = #tpu.core_type<tc>, window_params = [{transform_indices = @transform_0, window_bounds = array<i64: 8, 15>}, {transform_indices = @transform_1, window_bounds = array<i64: 8, 1>}, {pipeline_mode = #tpu.pipeline_mode<synchronous>, transform_indices = @transform_2, window_bounds = array<i64: 1, 15>}, {transform_indices = @transform_3, window_bounds = array<i64: 1, 1>}, {transform_indices = @transform_4, window_bounds = array<i64: 1, 1>}, {transform_indices = @transform_5, window_bounds = array<i64: 8, 1>}]} {
    %c0 = arith.constant 0 : index
    %c0_0 = arith.constant 0 : index
    %0 = vector.load %arg1[%c0, %c0_0] : memref<8x15xf32, #tpu.memory_space<vmem>>, vector<8x15xf32>
    %c0_1 = arith.constant 0 : index
    %c0_2 = arith.constant 0 : index
    %1 = vector.load %arg2[%c0_1, %c0_2] : memref<8x1xf32, #tpu.memory_space<vmem>>, vector<8x1xf32>
    %c0_3 = arith.constant 0 : index
    %c0_4 = arith.constant 0 : index
    %2 = vector.load %arg3[%c0_3, %c0_4] : memref<1x15xf32, #tpu.memory_space<vmem>>, vector<1x15xf32>
    %c0_5 = arith.constant 0 : index
    %c0_6 = arith.constant 0 : index
    %3 = memref.load %arg4[%c0_5, %c0_6] : memref<1x1xf32, #tpu.memory_space<smem>>
    %c0_7 = arith.constant 0 : index
    %c0_8 = arith.constant 0 : index
    %4 = memref.load %arg5[%c0_7, %c0_8] : memref<1x1xf32, #tpu.memory_space<smem>>
    %5 = vector.broadcast %2 : vector<1x15xf32> to vector<8x15xf32>
    %6 = arith.mulf %0, %5 : vector<8x15xf32>
    %cst = arith.constant dense<0.000000e+00> : vector<8xf32>
    %7 = vector.multi_reduction <add>, %6, %cst [1] : vector<8x15xf32> to vector<8xf32>
    %8 = vector.shape_cast %7 : vector<8xf32> to vector<8x1xf32>
    %9 = vector.broadcast %3 : f32 to vector<8x1xf32>
    %10 = arith.addf %8, %9 : vector<8x1xf32>
    %cst_9 = arith.constant 5.000000e-01 : f32
    %11 = vector.broadcast %cst_9 : f32 to vector<8x1xf32>
    %12 = arith.subf %1, %11 : vector<8x1xf32>
    %13 = vector.broadcast %4 : f32 to vector<8x1xf32>
    %14 = arith.mulf %12, %13 : vector<8x1xf32>
    %15 = arith.addf %14, %10 : vector<8x1xf32>
    %16 = arith.negf %15 : vector<8x1xf32>
    %17 = math.exp %16 : vector<8x1xf32>
    %cst_10 = arith.constant 1.000000e+00 : f32
    %18 = vector.broadcast %cst_10 : f32 to vector<8x1xf32>
    %19 = arith.addf %18, %17 : vector<8x1xf32>
    %20 = arith.divf %18, %19 : vector<8x1xf32>
    %c0_11 = arith.constant 0 : index
    %c0_12 = arith.constant 0 : index
    %21 = vector.load %arg6[%c0_11, %c0_12] : memref<8x1xf32, #tpu.memory_space<vmem>>, vector<8x1xf32>
    tpu.vector_store %arg6[%c0_11, %c0_12], %20 {strides = array<i32>} : memref<8x1xf32, #tpu.memory_space<vmem>>, vector<8x1xf32>,
    return
  }
  func.func @transform_0(%arg0: i32) -> (i32, i32) {
    %c0_i32 = arith.constant 0 : i32
    %c0_i32_0 = arith.constant 0 : i32
    return %arg0, %c0_i32 : i32, i32
  }
  func.func @transform_1(%arg0: i32) -> (i32, i32) {
    %c0_i32 = arith.constant 0 : i32
    %c0_i32_0 = arith.constant 0 : i32
    return %arg0, %c0_i32 : i32, i32
  }
  func.func @transform_2(%arg0: i32) -> (i32, i32) {
    %c0_i32 = arith.constant 0 : i32
    %c0_i32_0 = arith.constant 0 : i32
    %c0_i32_1 = arith.constant 0 : i32
    return %c0_i32, %c0_i32_0 : i32, i32
  }
  func.func @transform_3(%arg0: i32) -> (i32, i32) {
    %c0_i32 = arith.constant 0 : i32
    %c0_i32_0 = arith.constant 0 : i32
    %c0_i32_1 = arith.constant 0 : i32
    return %c0_i32, %c0_i32_0 : i32, i32
  }
  func.func @transform_4(%arg0: i32) -> (i32, i32) {
    %c0_i32 = arith.constant 0 : i32
    %c0_i32_0 = arith.constant 0 : i32
    %c0_i32_1 = arith.constant 0 : i32
    return %c0_i32, %c0_i32_0 : i32, i32
  }
  func.func @transform_5(%arg0: i32) -> (i32, i32) {
    %c0_i32 = arith.constant 0 : i32
    %c0_i32_0 = arith.constant 0 : i32
    return %arg0, %c0_i32 : i32, i32
  }
}

</mosaic_0001>

<llo_original>
// kernel: tpu_custom_call.1
$region0: #{tpu_custom_call.1}
  #allocation0 [shape = 'u32[]', space=smem, size = 0x4, offset = 0x4, fixed_abs, tag = 'smem constant byte address 0x4 - core index']
  #allocation1 [shape = 'u32[144,128]{1,0:T(1,128)}', space=vmem, size = 0x12000, scoped, tag = 'internal scratch']
  #allocation2 [shape = 'f32[1,1]{1,0:T(1,128)S(6)}', space=smem, size = 0x200, scoped, tag = 'scoped memory for tpu_custom_call.1']
  #allocation3 [shape = 'f32[1,1]{1,0:T(1,128)S(6)}', space=smem, size = 0x200, scoped, tag = 'scoped memory for tpu_custom_call.1']
  %s0 = inlined_call_operand.vmem [shape: f32[8,15], index: 0, kind: input, shape index: {}]
  %s1 = inlined_call_operand.vmem [shape: f32[8,1], index: 1, kind: input, shape index: {}]
  %s2 = inlined_call_operand.vmem [shape: f32[1,15], index: 2, kind: input, shape index: {}]
  %s3 = inlined_call_operand.<no memory space> [shape: f32[1,1], index: 3, kind: input, shape index: {}]
  %s4 = inlined_call_operand.<no memory space> [shape: f32[1,1], index: 4, kind: input, shape index: {}]
  %s5 = inlined_call_operand.vmem [shape: f32[8,1], index: 5, kind: output, shape index: {}]
  %s6 = sld [smem:[#allocation0]]
  $region30: #{tpu_custom_call.1} parent=0
    _
  %s8 = ssub.s32 1, %s6
  %s9 = scalar_select 0, %s8, %s6
  %10 = sst [smem:[#allocation2]] %s3
  %11 = sst [smem:[#allocation3]] %s4
  // Predicated region
  $region2: #{tpu_custom_call.1} parent=0 // pred_check
    _
  $region3: #{tpu_custom_call.1} parent=0 // pred_check_branch
    %13 = sbr.rel (0) target = $region5
  $region4: #{tpu_custom_call.1} parent=0 // pred_region
    _
  $region5: #{tpu_custom_call.1} parent=0 // pred_fallthru
    _
  // Predicated region
  $region6: #{tpu_custom_call.1} parent=0 // pred_check
    _
  $region7: #{tpu_custom_call.1} parent=0 // pred_check_branch
    %15 = sbr.rel (0) target = $region9
  $region8: #{tpu_custom_call.1} parent=0 // pred_region
    _
  $region9: #{tpu_custom_call.1} parent=0 // pred_fallthru
    _
  // Predicated region
  $region10: #{tpu_custom_call.1} parent=0 // pred_check
    _
  $region11: #{tpu_custom_call.1} parent=0 // pred_check_branch
    %17 = sbr.rel (0) target = $region13
  $region12: #{tpu_custom_call.1} parent=0 // pred_region
    _
  $region13: #{tpu_custom_call.1} parent=0 // pred_fallthru
    _
  // Predicated region
  $region14: #{tpu_custom_call.1} parent=0 // pred_check
    _
  $region15: #{tpu_custom_call.1} parent=0 // pred_check_branch
    %19 = sbr.rel (0) target = $region17
  $region16: #{tpu_custom_call.1} parent=0 // pred_region
    _
  $region17: #{tpu_custom_call.1} parent=0 // pred_fallthru
    _
  // Predicated region
  $region18: #{tpu_custom_call.1} parent=0 // pred_check
    _
  $region19: #{tpu_custom_call.1} parent=0 // pred_check_branch
    %21 = sbr.rel (0) target = $region21
  $region20: #{tpu_custom_call.1} parent=0 // pred_region
    _
  $region21: #{tpu_custom_call.1} parent=0 // pred_fallthru
    _
  %v22 = vld [vmem:[%s0] sm:$0xff]
  %v23 = vld [vmem:[%s1] sm:$0xff]
  %v24 = vld [vmem:[%s2] sm:$0x1]
  %s25 = sld [smem:[#allocation2]]
  %s26 = sld [smem:[#allocation3]]
  %v28 = vlaneseq
  %v29 = vshrl.u32 %v28, 7
  %v30 = vsub.s32 0, %v29
  %v31 = vrot.slane %v24, %v30
  %v33 = vmul.f32 %v22, %v31
  %vm34 = vcmask 121856
  %v35 = vsel %vm34, %v33, 0.0
  %36 = vadd.xlane.f32.xlu0 %v35
  %v37 = vpop.xlane.xlu0 %36
  %v38 = vstv %s25
  %v39 = vadd.f32 %v37, %v38
  %v40 = vsub.f32 %v23, 0.5
  %v41 = vstv %s26
  %v42 = vmul.f32 %v40, %v41
  %v43 = vadd.f32 %v42, %v39
  %v44 = vxor.u32 %v43, 2147483648
  %v45 = vmul.f32 %v44, 1.442695
  %v46 = vpow.pop %v45
  %v47 = vadd.f32 %v46, 1.0
  %v48 = vrcp.pop %v47
  %v49 = vmul.f32 1.0, %v48
  %vm50 = vcmask 7168
  %51 = vst.msk [vmem:[%s5] sm:$0xff] %vm50, %v49
  // Predicated region
  $region22: #{tpu_custom_call.1} parent=0 // pred_check
    _
  $region23: #{tpu_custom_call.1} parent=0 // pred_check_branch
    %53 = sbr.rel (0) target = $region25
  $region24: #{tpu_custom_call.1} parent=0 // pred_region
    _
  $region25: #{tpu_custom_call.1} parent=0 // pred_fallthru
    _
  // Predicated region
  $region26: #{tpu_custom_call.1} parent=0 // pred_check
    _
  $region27: #{tpu_custom_call.1} parent=0 // pred_check_branch
    %55 = sbr.rel (0) target = $region29
  $region28: #{tpu_custom_call.1} parent=0 // pred_region
    _
  $region29: #{tpu_custom_call.1} parent=0 // pred_fallthru
    _

</llo_original>
